<compile_context>
chip_gen: v5e
topology: v5e:2x2
jax: 0.10.0
libtpu: 0.0.40
codegen_flags: <defaults>
</compile_context>

<pallas_src>
import jax
import jax.numpy as jnp
from jax.experimental import pallas as pl
from jax.experimental.pallas import tpu as pltpu

NUM_RBF = 16
CUTOFF_LOWER = 0.0
CUTOFF_UPPER = 24.0

LANE = 128                    # distances per kernel row
OUT_LANE = LANE * NUM_RBF     # 2048 lane-dense output columns per row
BLOCK_ROWS = 512              # rows per grid step -> 4 MiB f32 output block


def _initial_params():
    """Deterministic parameter init, matching GaussianSmearing._initial_params."""
    offset = jnp.linspace(CUTOFF_LOWER, CUTOFF_UPPER, NUM_RBF, dtype=jnp.float32)
    coeff = -0.5 / (offset[1] - offset[0]) ** 2
    return offset, coeff


def _gaussian_smearing_kernel(coeff_ref, off_ref, rep_ref, dist_ref, out_ref):
    # coeff_ref: SMEM (1, 1) f32
    # off_ref  : VMEM (1, OUT_LANE) f32    off_ref[0, 16*q + r] = offset[r]
    # rep_ref  : VMEM (LANE, OUT_LANE) bf16 one-hot: rep[k, 16*q + r] = (k == q)
    # dist_ref : VMEM (TR, LANE) f32
    # out_ref  : VMEM (TR, OUT_LANE) out_dtype   (lane-dense, final memory order)
    coeff = coeff_ref[0, 0]
    d = dist_ref[...]                                   # (TR, LANE) f32

    # Exact 3-way bf16 split: d == hi + mid + lo, each term exactly
    # representable in bf16 (the round-to-nearest residual of an f32 w.r.t.
    # bf16 has <= 16 significant bits; its own residual has <= 8, i.e. exact).
    hi = d.astype(jnp.bfloat16)
    r1 = d - hi.astype(jnp.float32)
    mid = r1.astype(jnp.bfloat16)
    lo = (r1 - mid.astype(jnp.float32)).astype(jnp.bfloat16)

    rep = rep_ref[...]                                  # (LANE, OUT_LANE) bf16
    # MXU one-hot expansion: de[t, 16*q + r] == d[t, q], exactly, in f32.
    de = (jnp.dot(hi, rep, preferred_element_type=jnp.float32)
          + jnp.dot(mid, rep, preferred_element_type=jnp.float32)
          + jnp.dot(lo, rep, preferred_element_type=jnp.float32))

    diff = de - off_ref[...]                            # (TR, OUT_LANE)
    arg = coeff * diff * diff
    if out_ref.dtype == jnp.bfloat16:
        # bf16 exp argument: halves EUP pressure once the output is bf16
        # (relevant on v7x); precision is already bounded by the bf16 store.
        out_ref[...] = jnp.exp(arg.astype(jnp.bfloat16))
    else:
        out_ref[...] = jnp.exp(arg).astype(out_ref.dtype)


def gaussian_smearing(dist, offset, coeff, *, block_rows=BLOCK_ROWS,
                      out_dtype=jnp.float32):
    """RBF expansion: returns array of shape (*dist.shape, NUM_RBF)."""
    orig_shape = dist.shape
    flat = dist.reshape(-1).astype(jnp.float32)
    n = flat.shape[0]

    # Rows of 128 distances, rounded to a sublane multiple, then to the tile.
    rows = max(1, -(-n // LANE))
    rows = ((rows + 7) // 8) * 8
    tr = min(block_rows, rows)
    tr = max(8, (tr // 8) * 8)
    rows_pad = ((rows + tr - 1) // tr) * tr
    n_pad = rows_pad * LANE

    if n_pad != n:
        flat = jnp.pad(flat, (0, n_pad - n))
    d2 = flat.reshape(rows_pad, LANE)

    coeff_arr = jnp.asarray(coeff, dtype=jnp.float32).reshape(1, 1)
    offset = jnp.asarray(offset, dtype=jnp.float32).reshape(NUM_RBF)

    # off2[0, 16*q + r] = offset[r]
    off2 = jnp.tile(offset, LANE).reshape(1, OUT_LANE)
    # rep[k, 16*q + r] = 1 iff k == q   (0/1 values: exactly bf16-representable)
    q_of_lane = jnp.arange(OUT_LANE, dtype=jnp.int32) // NUM_RBF
    rep = (jnp.arange(LANE, dtype=jnp.int32)[:, None] == q_of_lane[None, :]
           ).astype(jnp.bfloat16)

    out = pl.pallas_call(
        _gaussian_smearing_kernel,
        out_shape=jax.ShapeDtypeStruct((rows_pad, OUT_LANE), out_dtype),
        grid=(rows_pad // tr,),
        in_specs=[
            pl.BlockSpec(memory_space=pltpu.MemorySpace.SMEM),       # coeff
            pl.BlockSpec((1, OUT_LANE), lambda i: (0, 0)),           # offsets (tiled)
            pl.BlockSpec((LANE, OUT_LANE), lambda i: (0, 0)),        # one-hot matrix
            pl.BlockSpec((tr, LANE), lambda i: (i, 0)),              # dist tile
        ],
        out_specs=pl.BlockSpec((tr, OUT_LANE), lambda i: (i, 0)),
        compiler_params=pltpu.CompilerParams(
            dimension_semantics=("parallel",),
            vmem_limit_bytes=48 * 1024 * 1024),
    )(coeff_arr, off2, rep, d2)

    # Memory order already matches (..., NUM_RBF): reshape only, no transpose.
    out = out.reshape(n_pad, NUM_RBF)
    if n_pad != n:
        out = out[:n]
    return out.reshape(*orig_shape, NUM_RBF)


if __name__ == "__main__":
    offset, coeff = _initial_params()

    # Small example: 8x128 pairwise distances in [cutoff_lower, cutoff_upper].
    dist = jax.random.uniform(
        jax.random.PRNGKey(0), (8, 128), dtype=jnp.float32,
        minval=CUTOFF_LOWER, maxval=CUTOFF_UPPER)
    out = jax.block_until_ready(gaussian_smearing(dist, offset, coeff))
    ref = jnp.exp(coeff * (dist[..., None] - offset) ** 2)
    assert out.shape == (8, 128, NUM_RBF)
    assert jnp.allclose(out, ref, atol=1e-5, rtol=1e-5)

    # Second check exercising the padding / non-multiple-of-128 path.
    dist2 = jax.random.uniform(
        jax.random.PRNGKey(1), (3, 50), dtype=jnp.float32,
        minval=CUTOFF_LOWER, maxval=CUTOFF_UPPER)
    out2 = jax.block_until_ready(gaussian_smearing(dist2, offset, coeff))
    ref2 = jnp.exp(coeff * (dist2[..., None] - offset) ** 2)
    assert out2.shape == (3, 50, NUM_RBF)
    assert jnp.allclose(out2, ref2, atol=1e-5, rtol=1e-5)

    print("KERNEL_OK")
</pallas_src>

<mosaic_0001>
module attributes {stable_mosaic.version = 11 : i64} {
  func.func @_gaussian_smearing_kernel(%arg0: i32, %arg1: memref<1x1xf32, #tpu.memory_space<smem>>, %arg2: memref<1x2048xf32, #tpu.memory_space<vmem>>, %arg3: memref<128x2048xbf16, #tpu.memory_space<vmem>>, %arg4: memref<8x128xf32, #tpu.memory_space<vmem>>, %arg5: memref<8x2048xf32, #tpu.memory_space<vmem>>) attributes {dimension_semantics = [#tpu.dimension_semantics<parallel>], iteration_bounds = array<i64: 1>, scalar_prefetch = 0 : i64, scratch_operands = 0 : i64, tpu.core_type = #tpu.core_type<tc>, window_params = [{transform_indices = @transform_0, window_bounds = array<i64: 1, 1>}, {pipeline_mode = #tpu.pipeline_mode<synchronous>, transform_indices = @transform_1, window_bounds = array<i64: 1, 2048>}, {pipeline_mode = #tpu.pipeline_mode<synchronous>, transform_indices = @transform_2, window_bounds = array<i64: 128, 2048>}, {transform_indices = @transform_3, window_bounds = array<i64: 8, 128>}, {transform_indices = @transform_4, window_bounds = array<i64: 8, 2048>}]} {
    %c0 = arith.constant 0 : index
    %c0_0 = arith.constant 0 : index
    %0 = memref.load %arg1[%c0, %c0_0] : memref<1x1xf32, #tpu.memory_space<smem>>
    %c0_1 = arith.constant 0 : index
    %c0_2 = arith.constant 0 : index
    %1 = vector.load %arg4[%c0_1, %c0_2] : memref<8x128xf32, #tpu.memory_space<vmem>>, vector<8x128xf32>
    %2 = arith.truncf %1 : vector<8x128xf32> to vector<8x128xbf16>
    %3 = arith.extf %2 : vector<8x128xbf16> to vector<8x128xf32>
    %4 = arith.subf %1, %3 : vector<8x128xf32>
    %5 = arith.truncf %4 : vector<8x128xf32> to vector<8x128xbf16>
    %6 = arith.extf %5 : vector<8x128xbf16> to vector<8x128xf32>
    %7 = arith.subf %4, %6 : vector<8x128xf32>
    %8 = arith.truncf %7 : vector<8x128xf32> to vector<8x128xbf16>
    %c0_3 = arith.constant 0 : index
    %c0_4 = arith.constant 0 : index
    %9 = vector.load %arg3[%c0_3, %c0_4] : memref<128x2048xbf16, #tpu.memory_space<vmem>>, vector<128x2048xbf16>
    %cst = arith.constant dense<0.000000e+00> : vector<8x2048xf32>
    %10 = tpu.matmul %2, %9, %cst {dimension_numbers = #tpu.dot_dimension_numbers<[1], [0], [0], [1], [0, 0, 1, 1], [], []>} : vector<8x128xbf16>, vector<128x2048xbf16>, vector<8x2048xf32> -> vector<8x2048xf32>
    %cst_5 = arith.constant dense<0.000000e+00> : vector<8x2048xf32>
    %11 = tpu.matmul %5, %9, %cst_5 {dimension_numbers = #tpu.dot_dimension_numbers<[1], [0], [0], [1], [0, 0, 1, 1], [], []>} : vector<8x128xbf16>, vector<128x2048xbf16>, vector<8x2048xf32> -> vector<8x2048xf32>
    %12 = arith.addf %10, %11 : vector<8x2048xf32>
    %cst_6 = arith.constant dense<0.000000e+00> : vector<8x2048xf32>
    %13 = tpu.matmul %8, %9, %cst_6 {dimension_numbers = #tpu.dot_dimension_numbers<[1], [0], [0], [1], [0, 0, 1, 1], [], []>} : vector<8x128xbf16>, vector<128x2048xbf16>, vector<8x2048xf32> -> vector<8x2048xf32>
    %14 = arith.addf %12, %13 : vector<8x2048xf32>
    %c0_7 = arith.constant 0 : index
    %c0_8 = arith.constant 0 : index
    %15 = vector.load %arg2[%c0_7, %c0_8] : memref<1x2048xf32, #tpu.memory_space<vmem>>, vector<1x2048xf32>
    %16 = vector.broadcast %15 : vector<1x2048xf32> to vector<8x2048xf32>
    %17 = arith.subf %14, %16 : vector<8x2048xf32>
    %18 = vector.broadcast %0 : f32 to vector<8x2048xf32>
    %19 = arith.mulf %18, %17 : vector<8x2048xf32>
    %20 = arith.mulf %19, %17 : vector<8x2048xf32>
    %21 = math.exp %20 : vector<8x2048xf32>
    %c0_9 = arith.constant 0 : index
    %c0_10 = arith.constant 0 : index
    %22 = vector.load %arg5[%c0_9, %c0_10] : memref<8x2048xf32, #tpu.memory_space<vmem>>, vector<8x2048xf32>
    tpu.vector_store %arg5[%c0_9, %c0_10], %21 {strides = array<i32>} : memref<8x2048xf32, #tpu.memory_space<vmem>>, vector<8x2048xf32>,
    return
  }
  func.func @transform_0(%arg0: i32) -> (i32, i32) {
    %c0_i32 = arith.constant 0 : i32
    %c0_i32_0 = arith.constant 0 : i32
    %c0_i32_1 = arith.constant 0 : i32
    return %c0_i32, %c0_i32_0 : i32, i32
  }
  func.func @transform_1(%arg0: i32) -> (i32, i32) {
    %c0_i32 = arith.constant 0 : i32
    %c0_i32_0 = arith.constant 0 : i32
    %c0_i32_1 = arith.constant 0 : i32
    return %c0_i32, %c0_i32_0 : i32, i32
  }
  func.func @transform_2(%arg0: i32) -> (i32, i32) {
    %c0_i32 = arith.constant 0 : i32
    %c0_i32_0 = arith.constant 0 : i32
    %c0_i32_1 = arith.constant 0 : i32
    return %c0_i32, %c0_i32_0 : i32, i32
  }
  func.func @transform_3(%arg0: i32) -> (i32, i32) {
    %c0_i32 = arith.constant 0 : i32
    %c0_i32_0 = arith.constant 0 : i32
    return %arg0, %c0_i32 : i32, i32
  }
  func.func @transform_4(%arg0: i32) -> (i32, i32) {
    %c0_i32 = arith.constant 0 : i32
    %c0_i32_0 = arith.constant 0 : i32
    return %arg0, %c0_i32 : i32, i32
  }
}

</mosaic_0001>

<llo_original>
// kernel: tpu_custom_call.1
$region0: #{tpu_custom_call.1}
  #allocation0 [shape = 'u32[]', space=smem, size = 0x4, offset = 0x4, fixed_abs, tag = 'smem constant byte address 0x4 - core index']
  #allocation1 [shape = 'u32[72,128]{1,0:T(1,128)}', space=vmem, size = 0x9000, scoped, tag = 'internal scratch']
  #allocation2 [shape = 'f32[1,1]{1,0:T(1,128)S(6)}', space=smem, size = 0x200, scoped, tag = 'scoped memory for tpu_custom_call.1']
  %s0 = inlined_call_operand.<no memory space> [shape: f32[1,1], index: 0, kind: input, shape index: {}]
  %s1 = inlined_call_operand.hbm [shape: f32[1,2048], index: 1, kind: input, shape index: {}]
  %s2 = inlined_call_operand.hbm [shape: bf16[128,2048], index: 2, kind: input, shape index: {}]
  %s3 = inlined_call_operand.hbm [shape: f32[8,128], index: 3, kind: input, shape index: {}]
  %s4 = inlined_call_operand.hbm [shape: f32[8,2048], index: 4, kind: output, shape index: {}]
  %s5 = sld [smem:[#allocation0]]
  $region38: #{tpu_custom_call.1} parent=0
    _
  %s7 = ssub.s32 1, %s5
  %s8 = scalar_select 0, %s7, %s5
  %9 = sst [smem:[#allocation2]] %s0
  $region1: #{tpu_custom_call.1} parent=0
    #allocation3 [shape = 'u8[8192]{0}', space=vmem, size = 0x2000, scoped, tag = 'input window, operand 1, single buffered']
    #allocation4 [shape = 's32[1]{0}', space=sflag, size = 0x4, scoped, tag = 'scoped memory for tpu_custom_call.1']
    #allocation5 [shape = 's32[1]{0}', space=sflag, size = 0x4, scoped, tag = 'scoped memory for tpu_custom_call.1']
    #allocation6 [shape = 'u8[524288]{0}', space=vmem, size = 0x80000, scoped, tag = 'input window, operand 2, single buffered']
    #allocation7 [shape = 's32[1]{0}', space=sflag, size = 0x4, scoped, tag = 'scoped memory for tpu_custom_call.1']
    #allocation8 [shape = 'u8[4096]{0}', space=vmem, size = 0x1000, scoped, tag = 'input window, operand 3, single buffered']
    #allocation9 [shape = 'u8[65536]{0}', space=vmem, size = 0x10000, scoped, tag = 'output window, operand 0, single buffered']
    %10 = vsyncpa [#allocation4], 0
    %11 = vsyncpa [#allocation7], 0
    %12 = vsyncpa [#allocation5], 0
    // Predicated region
    $region2: #{tpu_custom_call.1} parent=1 // pred_check
      _
    $region3: #{tpu_custom_call.1} parent=1 // pred_check_branch
      %14 = sbr.rel (0) target = $region5
    $region4: #{tpu_custom_call.1} parent=1 // pred_region
      _
    $region5: #{tpu_custom_call.1} parent=1 // pred_fallthru
      _
    // Predicated region
    $region6: #{tpu_custom_call.1} parent=1 // pred_check
      _
    $region7: #{tpu_custom_call.1} parent=1 // pred_check_branch
      %16 = sbr.rel (0) target = $region9
    $region8: #{tpu_custom_call.1} parent=1 // pred_region
      %18 = vsyncadd [#allocation4], 0
      %s20 = sshll.u32 %s1, 4
      %s21 = int_to_ptr.hbm [resolvable:$true] %s20
      %s22 = sshll.u32 [#allocation3], 4
      %s23 = int_to_ptr.vmem [resolvable:$true] %s22
      %25 = dma.hbm_to_vmem [thread:$0]  %s21, 256, %s23, [#allocation4]
    $region9: #{tpu_custom_call.1} parent=1 // pred_fallthru
      _
    // Predicated region
    $region10: #{tpu_custom_call.1} parent=1 // pred_check
      _
    $region11: #{tpu_custom_call.1} parent=1 // pred_check_branch
      %27 = sbr.rel (0) target = $region13
    $region12: #{tpu_custom_call.1} parent=1 // pred_region
      %29 = vsyncadd [#allocation7], 0
      %s30 = sshll.u32 %s2, 4
      %s31 = int_to_ptr.hbm [resolvable:$true] %s30
      %s32 = sshll.u32 [#allocation6], 4
      %s33 = int_to_ptr.vmem [resolvable:$true] %s32
      %38 = dma.hbm_to_vmem [thread:$0]  %s31, 16384, %s33, [#allocation7], 1024, 1024, 64
    $region13: #{tpu_custom_call.1} parent=1 // pred_fallthru
      _
    // Predicated region
    $region14: #{tpu_custom_call.1} parent=1 // pred_check
      _
    $region15: #{tpu_custom_call.1} parent=1 // pred_check_branch
      %40 = sbr.rel (0) target = $region17
    $region16: #{tpu_custom_call.1} parent=1 // pred_region
      %42 = vsyncadd [#allocation7], 0
      %s44 = sshll.u32 %s3, 4
      %s45 = int_to_ptr.hbm [resolvable:$true] %s44
      %s46 = sshll.u32 [#allocation8], 4
      %s47 = int_to_ptr.vmem [resolvable:$true] %s46
      %49 = dma.hbm_to_vmem [thread:$0]  %s45, 128, %s47, [#allocation7]
    $region17: #{tpu_custom_call.1} parent=1 // pred_fallthru
      _
    // Predicated region
    $region18: #{tpu_custom_call.1} parent=1 // pred_check
      _
    $region19: #{tpu_custom_call.1} parent=1 // pred_check_branch
      %51 = sbr.rel (0) target = $region21
    $region20: #{tpu_custom_call.1} parent=1 // pred_region
      %53 = dma.done [#allocation4], 256
    $region21: #{tpu_custom_call.1} parent=1 // pred_fallthru
      _
    // Predicated region
    $region22: #{tpu_custom_call.1} parent=1 // pred_check
      _
    $region23: #{tpu_custom_call.1} parent=1 // pred_check_branch
      %55 = sbr.rel (0) target = $region25
    $region24: #{tpu_custom_call.1} parent=1 // pred_region
      %57 = dma.done [#allocation7], 16384
    $region25: #{tpu_custom_call.1} parent=1 // pred_fallthru
      _
    // Predicated region
    $region26: #{tpu_custom_call.1} parent=1 // pred_check
      _
    $region27: #{tpu_custom_call.1} parent=1 // pred_check_branch
      %59 = sbr.rel (0) target = $region29
    $region28: #{tpu_custom_call.1} parent=1 // pred_region
      %61 = dma.done [#allocation7], 128
    $region29: #{tpu_custom_call.1} parent=1 // pred_fallthru
      _
    %s62 = sld [smem:[#allocation2]]
    %v63 = vld [vmem:[#allocation8] sm:$0xff]
    %v64 = vpack.c.bf16 %v63, %v63
    %v65 = vunpack.c.l.bf16 %v64
    %v66 = vsub.f32 %v63, %v65
    %v67 = vpack.c.bf16 %v66, %v66
    %v68 = vunpack.c.l.bf16 %v67
    %v69 = vsub.f32 %v66, %v68
    %v70 = vpack.c.bf16 %v69, %v69
    %v71 = vld [vmem:[#allocation6] sm:$0xff]
    %v72 = vld [vmem:[#allocation6 + $0x8] sm:$0xff]
    %v73 = vld [vmem:[#allocation6 + $0x10] sm:$0xff]
    %v74 = vld [vmem:[#allocation6 + $0x18] sm:$0xff]
    %v75 = vld [vmem:[#allocation6 + $0x20] sm:$0xff]
    %v76 = vld [vmem:[#allocation6 + $0x28] sm:$0xff]
    %v77 = vld [vmem:[#allocation6 + $0x30] sm:$0xff]
    %v78 = vld [vmem:[#allocation6 + $0x38] sm:$0xff]
    %v79 = vld [vmem:[#allocation6 + $0x40] sm:$0xff]
    %v80 = vld [vmem:[#allocation6 + $0x48] sm:$0xff]
    %v81 = vld [vmem:[#allocation6 + $0x50] sm:$0xff]
    %v82 = vld [vmem:[#allocation6 + $0x58] sm:$0xff]
    %v83 = vld [vmem:[#allocation6 + $0x60] sm:$0xff]
    %v84 = vld [vmem:[#allocation6 + $0x68] sm:$0xff]
    %v85 = vld [vmem:[#allocation6 + $0x70] sm:$0xff]
    %v86 = vld [vmem:[#allocation6 + $0x78] sm:$0xff]
    %v87 = vld [vmem:[#allocation6 + $0x80] sm:$0xff]
    %v88 = vld [vmem:[#allocation6 + $0x88] sm:$0xff]
    %v89 = vld [vmem:[#allocation6 + $0x90] sm:$0xff]
    %v90 = vld [vmem:[#allocation6 + $0x98] sm:$0xff]
    %v91 = vld [vmem:[#allocation6 + $0xa0] sm:$0xff]
    %v92 = vld [vmem:[#allocation6 + $0xa8] sm:$0xff]
    %v93 = vld [vmem:[#allocation6 + $0xb0] sm:$0xff]
    %v94 = vld [vmem:[#allocation6 + $0xb8] sm:$0xff]
    %v95 = vld [vmem:[#allocation6 + $0xc0] sm:$0xff]
    %v96 = vld [vmem:[#allocation6 + $0xc8] sm:$0xff]
    %v97 = vld [vmem:[#allocation6 + $0xd0] sm:$0xff]
    %v98 = vld [vmem:[#allocation6 + $0xd8] sm:$0xff]
    %v99 = vld [vmem:[#allocation6 + $0xe0] sm:$0xff]
    %v100 = vld [vmem:[#allocation6 + $0xe8] sm:$0xff]
    %v101 = vld [vmem:[#allocation6 + $0xf0] sm:$0xff]
    %v102 = vld [vmem:[#allocation6 + $0xf8] sm:$0xff]
    %v103 = vld [vmem:[#allocation6 + $0x100] sm:$0xff]
    %v104 = vld [vmem:[#allocation6 + $0x108] sm:$0xff]
    %v105 = vld [vmem:[#allocation6 + $0x110] sm:$0xff]
    %v106 = vld [vmem:[#allocation6 + $0x118] sm:$0xff]
    %v107 = vld [vmem:[#allocation6 + $0x120] sm:$0xff]
    %v108 = vld [vmem:[#allocation6 + $0x128] sm:$0xff]
    %v109 = vld [vmem:[#allocation6 + $0x130] sm:$0xff]
    %v110 = vld [vmem:[#allocation6 + $0x138] sm:$0xff]
    %v111 = vld [vmem:[#allocation6 + $0x140] sm:$0xff]
    %v112 = vld [vmem:[#allocation6 + $0x148] sm:$0xff]
    %v113 = vld [vmem:[#allocation6 + $0x150] sm:$0xff]
    %v114 = vld [vmem:[#allocation6 + $0x158] sm:$0xff]
    %v115 = vld [vmem:[#allocation6 + $0x160] sm:$0xff]
    %v116 = vld [vmem:[#allocation6 + $0x168] sm:$0xff]
    %v117 = vld [vmem:[#allocation6 + $0x170] sm:$0xff]
    %v118 = vld [vmem:[#allocation6 + $0x178] sm:$0xff]
    %v119 = vld [vmem:[#allocation6 + $0x180] sm:$0xff]
    %v120 = vld [vmem:[#allocation6 + $0x188] sm:$0xff]
    %v121 = vld [vmem:[#allocation6 + $0x190] sm:$0xff]
    %v122 = vld [vmem:[#allocation6 + $0x198] sm:$0xff]
    %v123 = vld [vmem:[#allocation6 + $0x1a0] sm:$0xff]
    %v124 = vld [vmem:[#allocation6 + $0x1a8] sm:$0xff]
    %v125 = vld [vmem:[#allocation6 + $0x1b0] sm:$0xff]
    %v126 = vld [vmem:[#allocation6 + $0x1b8] sm:$0xff]
    %v127 = vld [vmem:[#allocation6 + $0x1c0] sm:$0xff]
    %v128 = vld [vmem:[#allocation6 + $0x1c8] sm:$0xff]
    %v129 = vld [vmem:[#allocation6 + $0x1d0] sm:$0xff]
    %v130 = vld [vmem:[#allocation6 + $0x1d8] sm:$0xff]
    %v131 = vld [vmem:[#allocation6 + $0x1e0] sm:$0xff]
    %v132 = vld [vmem:[#allocation6 + $0x1e8] sm:$0xff]
    %v133 = vld [vmem:[#allocation6 + $0x1f0] sm:$0xff]
    %v134 = vld [vmem:[#allocation6 + $0x1f8] sm:$0xff]
    %v135 = vld [vmem:[#allocation6 + $0x200] sm:$0xff]
    %v136 = vld [vmem:[#allocation6 + $0x208] sm:$0xff]
    %v137 = vld [vmem:[#allocation6 + $0x210] sm:$0xff]
    %v138 = vld [vmem:[#allocation6 + $0x218] sm:$0xff]
    %v139 = vld [vmem:[#allocation6 + $0x220] sm:$0xff]
    %v140 = vld [vmem:[#allocation6 + $0x228] sm:$0xff]
    %v141 = vld [vmem:[#allocation6 + $0x230] sm:$0xff]
    %v142 = vld [vmem:[#allocation6 + $0x238] sm:$0xff]
    %v143 = vld [vmem:[#allocation6 + $0x240] sm:$0xff]
    %v144 = vld [vmem:[#allocation6 + $0x248] sm:$0xff]
    %v145 = vld [vmem:[#allocation6 + $0x250] sm:$0xff]
    %v146 = vld [vmem:[#allocation6 + $0x258] sm:$0xff]
    %v147 = vld [vmem:[#allocation6 + $0x260] sm:$0xff]
    %v148 = vld [vmem:[#allocation6 + $0x268] sm:$0xff]
    %v149 = vld [vmem:[#allocation6 + $0x270] sm:$0xff]
    %v150 = vld [vmem:[#allocation6 + $0x278] sm:$0xff]
    %v151 = vld [vmem:[#allocation6 + $0x280] sm:$0xff]
    %v152 = vld [vmem:[#allocation6 + $0x288] sm:$0xff]
    %v153 = vld [vmem:[#allocation6 + $0x290] sm:$0xff]
    %v154 = vld [vmem:[#allocation6 + $0x298] sm:$0xff]
    %v155 = vld [vmem:[#allocation6 + $0x2a0] sm:$0xff]
    %v156 = vld [vmem:[#allocation6 + $0x2a8] sm:$0xff]
    %v157 = vld [vmem:[#allocation6 + $0x2b0] sm:$0xff]
    %v158 = vld [vmem:[#allocation6 + $0x2b8] sm:$0xff]
    %v159 = vld [vmem:[#allocation6 + $0x2c0] sm:$0xff]
    %v160 = vld [vmem:[#allocation6 + $0x2c8] sm:$0xff]
    %v161 = vld [vmem:[#allocation6 + $0x2d0] sm:$0xff]
    %v162 = vld [vmem:[#allocation6 + $0x2d8] sm:$0xff]
    %v163 = vld [vmem:[#allocation6 + $0x2e0] sm:$0xff]
    %v164 = vld [vmem:[#allocation6 + $0x2e8] sm:$0xff]
    %v165 = vld [vmem:[#allocation6 + $0x2f0] sm:$0xff]
    %v166 = vld [vmem:[#allocation6 + $0x2f8] sm:$0xff]
    %v167 = vld [vmem:[#allocation6 + $0x300] sm:$0xff]
    %v168 = vld [vmem:[#allocation6 + $0x308] sm:$0xff]
    %v169 = vld [vmem:[#allocation6 + $0x310] sm:$0xff]
    %v170 = vld [vmem:[#allocation6 + $0x318] sm:$0xff]
    %v171 = vld [vmem:[#allocation6 + $0x320] sm:$0xff]
    %v172 = vld [vmem:[#allocation6 + $0x328] sm:$0xff]
    %v173 = vld [vmem:[#allocation6 + $0x330] sm:$0xff]
    %v174 = vld [vmem:[#allocation6 + $0x338] sm:$0xff]
    %v175 = vld [vmem:[#allocation6 + $0x340] sm:$0xff]
    %v176 = vld [vmem:[#allocation6 + $0x348] sm:$0xff]
    %v177 = vld [vmem:[#allocation6 + $0x350] sm:$0xff]
    %v178 = vld [vmem:[#allocation6 + $0x358] sm:$0xff]
    %v179 = vld [vmem:[#allocation6 + $0x360] sm:$0xff]
    %v180 = vld [vmem:[#allocation6 + $0x368] sm:$0xff]
    %v181 = vld [vmem:[#allocation6 + $0x370] sm:$0xff]
    %v182 = vld [vmem:[#allocation6 + $0x378] sm:$0xff]
    %v183 = vld [vmem:[#allocation6 + $0x380] sm:$0xff]
    %v184 = vld [vmem:[#allocation6 + $0x388] sm:$0xff]
    %v185 = vld [vmem:[#allocation6 + $0x390] sm:$0xff]
    %v186 = vld [vmem:[#allocation6 + $0x398] sm:$0xff]
    %v187 = vld [vmem:[#allocation6 + $0x3a0] sm:$0xff]
    %v188 = vld [vmem:[#allocation6 + $0x3a8] sm:$0xff]
    %v189 = vld [vmem:[#allocation6 + $0x3b0] sm:$0xff]
    %v190 = vld [vmem:[#allocation6 + $0x3b8] sm:$0xff]
    %v191 = vld [vmem:[#allocation6 + $0x3c0] sm:$0xff]
    %v192 = vld [vmem:[#allocation6 + $0x3c8] sm:$0xff]
    %v193 = vld [vmem:[#allocation6 + $0x3d0] sm:$0xff]
    %v194 = vld [vmem:[#allocation6 + $0x3d8] sm:$0xff]
    %v195 = vld [vmem:[#allocation6 + $0x3e0] sm:$0xff]
    %v196 = vld [vmem:[#allocation6 + $0x3e8] sm:$0xff]
    %v197 = vld [vmem:[#allocation6 + $0x3f0] sm:$0xff]
    %v198 = vld [vmem:[#allocation6 + $0x3f8] sm:$0xff]
    %v327 = vunpack.c.l.b16 %v71
    %v328 = vunpack.c.h.b16 %v71
    %v329 = vunpack.c.l.b16 %v72
    %v330 = vunpack.c.h.b16 %v72
    %v331 = vunpack.c.l.b16 %v73
    %v332 = vunpack.c.h.b16 %v73
    %v333 = vunpack.c.l.b16 %v74
    %v334 = vunpack.c.h.b16 %v74
    %v335 = vunpack.c.l.b16 %v75
    %v336 = vunpack.c.h.b16 %v75
    %v337 = vunpack.c.l.b16 %v76
    %v338 = vunpack.c.h.b16 %v76
    %v339 = vunpack.c.l.b16 %v77
    %v340 = vunpack.c.h.b16 %v77
    %v341 = vunpack.c.l.b16 %v78
    %v342 = vunpack.c.h.b16 %v78
    %v343 = vunpack.c.l.b16 %v79
    %v344 = vunpack.c.h.b16 %v79
    %v345 = vunpack.c.l.b16 %v80
    %v346 = vunpack.c.h.b16 %v80
    %v347 = vunpack.c.l.b16 %v81
    %v348 = vunpack.c.h.b16 %v81
    %v349 = vunpack.c.l.b16 %v82
    %v350 = vunpack.c.h.b16 %v82
    %v351 = vunpack.c.l.b16 %v83
    %v352 = vunpack.c.h.b16 %v83
    %v353 = vunpack.c.l.b16 %v84
    %v354 = vunpack.c.h.b16 %v84
    %v355 = vunpack.c.l.b16 %v85
    %v356 = vunpack.c.h.b16 %v85
    %v357 = vunpack.c.l.b16 %v86
    %v358 = vunpack.c.h.b16 %v86
    %v359 = vunpack.c.l.b16 %v87
    %v360 = vunpack.c.h.b16 %v87
    %v361 = vunpack.c.l.b16 %v88
    %v362 = vunpack.c.h.b16 %v88
    %v363 = vunpack.c.l.b16 %v89
    %v364 = vunpack.c.h.b16 %v89
    %v365 = vunpack.c.l.b16 %v90
    %v366 = vunpack.c.h.b16 %v90
    %v367 = vunpack.c.l.b16 %v91
    %v368 = vunpack.c.h.b16 %v91
    %v369 = vunpack.c.l.b16 %v92
    %v370 = vunpack.c.h.b16 %v92
    %v371 = vunpack.c.l.b16 %v93
    %v372 = vunpack.c.h.b16 %v93
    %v373 = vunpack.c.l.b16 %v94
    %v374 = vunpack.c.h.b16 %v94
    %v375 = vunpack.c.l.b16 %v95
    %v376 = vunpack.c.h.b16 %v95
    %v377 = vunpack.c.l.b16 %v96
    %v378 = vunpack.c.h.b16 %v96
    %v379 = vunpack.c.l.b16 %v97
    %v380 = vunpack.c.h.b16 %v97
    %v381 = vunpack.c.l.b16 %v98
    %v382 = vunpack.c.h.b16 %v98
    %v383 = vunpack.c.l.b16 %v99
    %v384 = vunpack.c.h.b16 %v99
    %v385 = vunpack.c.l.b16 %v100
    %v386 = vunpack.c.h.b16 %v100
    %v387 = vunpack.c.l.b16 %v101
    %v388 = vunpack.c.h.b16 %v101
    %v389 = vunpack.c.l.b16 %v102
    %v390 = vunpack.c.h.b16 %v102
    %v391 = vunpack.c.l.b16 %v103
    %v392 = vunpack.c.h.b16 %v103
    %v393 = vunpack.c.l.b16 %v104
    %v394 = vunpack.c.h.b16 %v104
    %v395 = vunpack.c.l.b16 %v105
    %v396 = vunpack.c.h.b16 %v105
    %v397 = vunpack.c.l.b16 %v106
    %v398 = vunpack.c.h.b16 %v106
    %v399 = vunpack.c.l.b16 %v107
    %v400 = vunpack.c.h.b16 %v107
    %v401 = vunpack.c.l.b16 %v108
    %v402 = vunpack.c.h.b16 %v108
    %v403 = vunpack.c.l.b16 %v109
    %v404 = vunpack.c.h.b16 %v109
    %v405 = vunpack.c.l.b16 %v110
    %v406 = vunpack.c.h.b16 %v110
    %v407 = vunpack.c.l.b16 %v111
    %v408 = vunpack.c.h.b16 %v111
    %v409 = vunpack.c.l.b16 %v112
    %v410 = vunpack.c.h.b16 %v112
    %v411 = vunpack.c.l.b16 %v113
    %v412 = vunpack.c.h.b16 %v113
    %v413 = vunpack.c.l.b16 %v114
    %v414 = vunpack.c.h.b16 %v114
    %v415 = vunpack.c.l.b16 %v115
    %v416 = vunpack.c.h.b16 %v115
    %v417 = vunpack.c.l.b16 %v116
    %v418 = vunpack.c.h.b16 %v116
    %v419 = vunpack.c.l.b16 %v117
    %v420 = vunpack.c.h.b16 %v117
    %v421 = vunpack.c.l.b16 %v118
    %v422 = vunpack.c.h.b16 %v118
    %v423 = vunpack.c.l.b16 %v119
    %v424 = vunpack.c.h.b16 %v119
    %v425 = vunpack.c.l.b16 %v120
    %v426 = vunpack.c.h.b16 %v120
    %v427 = vunpack.c.l.b16 %v121
    %v428 = vunpack.c.h.b16 %v121
    %v429 = vunpack.c.l.b16 %v122
    %v430 = vunpack.c.h.b16 %v122
    %v431 = vunpack.c.l.b16 %v123
    %v432 = vunpack.c.h.b16 %v123
    %v433 = vunpack.c.l.b16 %v124
    %v434 = vunpack.c.h.b16 %v124
    %v435 = vunpack.c.l.b16 %v125
    %v436 = vunpack.c.h.b16 %v125
    %v437 = vunpack.c.l.b16 %v126
    %v438 = vunpack.c.h.b16 %v126
    %v439 = vunpack.c.l.b16 %v127
    %v440 = vunpack.c.h.b16 %v127
    %v441 = vunpack.c.l.b16 %v128
    %v442 = vunpack.c.h.b16 %v128
    %v443 = vunpack.c.l.b16 %v129
    %v444 = vunpack.c.h.b16 %v129
    %v445 = vunpack.c.l.b16 %v130
    %v446 = vunpack.c.h.b16 %v130
    %v447 = vunpack.c.l.b16 %v131
    %v448 = vunpack.c.h.b16 %v131
    %v449 = vunpack.c.l.b16 %v132
    %v450 = vunpack.c.h.b16 %v132
    %v451 = vunpack.c.l.b16 %v133
    %v452 = vunpack.c.h.b16 %v133
    %v453 = vunpack.c.l.b16 %v134
    %v454 = vunpack.c.h.b16 %v134
    %v455 = vunpack.c.l.b16 %v135
    %v456 = vunpack.c.h.b16 %v135
    %v457 = vunpack.c.l.b16 %v136
    %v458 = vunpack.c.h.b16 %v136
    %v459 = vunpack.c.l.b16 %v137
    %v460 = vunpack.c.h.b16 %v137
    %v461 = vunpack.c.l.b16 %v138
    %v462 = vunpack.c.h.b16 %v138
    %v463 = vunpack.c.l.b16 %v139
    %v464 = vunpack.c.h.b16 %v139
    %v465 = vunpack.c.l.b16 %v140
    %v466 = vunpack.c.h.b16 %v140
    %v467 = vunpack.c.l.b16 %v141
    %v468 = vunpack.c.h.b16 %v141
    %v469 = vunpack.c.l.b16 %v142
    %v470 = vunpack.c.h.b16 %v142
    %v471 = vunpack.c.l.b16 %v143
    %v472 = vunpack.c.h.b16 %v143
    %v473 = vunpack.c.l.b16 %v144
    %v474 = vunpack.c.h.b16 %v144
    %v475 = vunpack.c.l.b16 %v145
    %v476 = vunpack.c.h.b16 %v145
    %v477 = vunpack.c.l.b16 %v146
    %v478 = vunpack.c.h.b16 %v146
    %v479 = vunpack.c.l.b16 %v147
    %v480 = vunpack.c.h.b16 %v147
    %v481 = vunpack.c.l.b16 %v148
    %v482 = vunpack.c.h.b16 %v148
    %v483 = vunpack.c.l.b16 %v149
    %v484 = vunpack.c.h.b16 %v149
    %v485 = vunpack.c.l.b16 %v150
    %v486 = vunpack.c.h.b16 %v150
    %v487 = vunpack.c.l.b16 %v151
    %v488 = vunpack.c.h.b16 %v151
    %v489 = vunpack.c.l.b16 %v152
    %v490 = vunpack.c.h.b16 %v152
    %v491 = vunpack.c.l.b16 %v153
    %v492 = vunpack.c.h.b16 %v153
    %v493 = vunpack.c.l.b16 %v154
    %v494 = vunpack.c.h.b16 %v154
    %v495 = vunpack.c.l.b16 %v155
    %v496 = vunpack.c.h.b16 %v155
    %v497 = vunpack.c.l.b16 %v156
    %v498 = vunpack.c.h.b16 %v156
    %v499 = vunpack.c.l.b16 %v157
    %v500 = vunpack.c.h.b16 %v157
    %v501 = vunpack.c.l.b16 %v158
    %v502 = vunpack.c.h.b16 %v158
    %v503 = vunpack.c.l.b16 %v159
    %v504 = vunpack.c.h.b16 %v159
    %v505 = vunpack.c.l.b16 %v160
    %v506 = vunpack.c.h.b16 %v160
    %v507 = vunpack.c.l.b16 %v161
    %v508 = vunpack.c.h.b16 %v161
    %v509 = vunpack.c.l.b16 %v162
    %v510 = vunpack.c.h.b16 %v162
    %v511 = vunpack.c.l.b16 %v163
    %v512 = vunpack.c.h.b16 %v163
    %v513 = vunpack.c.l.b16 %v164
    %v514 = vunpack.c.h.b16 %v164
    %v515 = vunpack.c.l.b16 %v165
    %v516 = vunpack.c.h.b16 %v165
    %v517 = vunpack.c.l.b16 %v166
    %v518 = vunpack.c.h.b16 %v166
    %v519 = vunpack.c.l.b16 %v167
    %v520 = vunpack.c.h.b16 %v167
    %v521 = vunpack.c.l.b16 %v168
    %v522 = vunpack.c.h.b16 %v168
    %v523 = vunpack.c.l.b16 %v169
    %v524 = vunpack.c.h.b16 %v169
    %v525 = vunpack.c.l.b16 %v170
    %v526 = vunpack.c.h.b16 %v170
    %v527 = vunpack.c.l.b16 %v171
    %v528 = vunpack.c.h.b16 %v171
    %v529 = vunpack.c.l.b16 %v172
    %v530 = vunpack.c.h.b16 %v172
    %v531 = vunpack.c.l.b16 %v173
    %v532 = vunpack.c.h.b16 %v173
    %v533 = vunpack.c.l.b16 %v174
    %v534 = vunpack.c.h.b16 %v174
    %v535 = vunpack.c.l.b16 %v175
    %v536 = vunpack.c.h.b16 %v175
    %v537 = vunpack.c.l.b16 %v176
    %v538 = vunpack.c.h.b16 %v176
    %v539 = vunpack.c.l.b16 %v177
    %v540 = vunpack.c.h.b16 %v177
    %v541 = vunpack.c.l.b16 %v178
    %v542 = vunpack.c.h.b16 %v178
    %v543 = vunpack.c.l.b16 %v179
    %v544 = vunpack.c.h.b16 %v179
    %v545 = vunpack.c.l.b16 %v180
    %v546 = vunpack.c.h.b16 %v180
    %v547 = vunpack.c.l.b16 %v181
    %v548 = vunpack.c.h.b16 %v181
    %v549 = vunpack.c.l.b16 %v182
    %v550 = vunpack.c.h.b16 %v182
    %v551 = vunpack.c.l.b16 %v183
    %v552 = vunpack.c.h.b16 %v183
    %v553 = vunpack.c.l.b16 %v184
    %v554 = vunpack.c.h.b16 %v184
    %v555 = vunpack.c.l.b16 %v185
    %v556 = vunpack.c.h.b16 %v185
    %v557 = vunpack.c.l.b16 %v186
    %v558 = vunpack.c.h.b16 %v186
    %v559 = vunpack.c.l.b16 %v187
    %v560 = vunpack.c.h.b16 %v187
    %v561 = vunpack.c.l.b16 %v188
    %v562 = vunpack.c.h.b16 %v188
    %v563 = vunpack.c.l.b16 %v189
    %v564 = vunpack.c.h.b16 %v189
    %v565 = vunpack.c.l.b16 %v190
    %v566 = vunpack.c.h.b16 %v190
    %v567 = vunpack.c.l.b16 %v191
    %v568 = vunpack.c.h.b16 %v191
    %v569 = vunpack.c.l.b16 %v192
    %v570 = vunpack.c.h.b16 %v192
    %v571 = vunpack.c.l.b16 %v193
    %v572 = vunpack.c.h.b16 %v193
    %v573 = vunpack.c.l.b16 %v194
    %v574 = vunpack.c.h.b16 %v194
    %v575 = vunpack.c.l.b16 %v195
    %v576 = vunpack.c.h.b16 %v195
    %v577 = vunpack.c.l.b16 %v196
    %v578 = vunpack.c.h.b16 %v196
    %v579 = vunpack.c.l.b16 %v197
    %v580 = vunpack.c.h.b16 %v197
    %v581 = vunpack.c.l.b16 %v198
    %v582 = vunpack.c.h.b16 %v198
    %v583 = vpack.c.b16 %v343, %v327
    %v584 = vpack.c.b16 %v344, %v328
    %v585 = vpack.c.b16 %v345, %v329
    %v586 = vpack.c.b16 %v346, %v330
    %v587 = vpack.c.b16 %v347, %v331
    %v588 = vpack.c.b16 %v348, %v332
    %v589 = vpack.c.b16 %v349, %v333
    %v590 = vpack.c.b16 %v350, %v334
    %v591 = vpack.c.b16 %v351, %v335
    %v592 = vpack.c.b16 %v352, %v336
    %v593 = vpack.c.b16 %v353, %v337
    %v594 = vpack.c.b16 %v354, %v338
    %v595 = vpack.c.b16 %v355, %v339
    %v596 = vpack.c.b16 %v356, %v340
    %v597 = vpack.c.b16 %v357, %v341
    %v598 = vpack.c.b16 %v358, %v342
    %v599 = vpack.c.b16 %v375, %v359
    %v600 = vpack.c.b16 %v376, %v360
    %v601 = vpack.c.b16 %v377, %v361
    %v602 = vpack.c.b16 %v378, %v362
    %v603 = vpack.c.b16 %v379, %v363
    %v604 = vpack.c.b16 %v380, %v364
    %v605 = vpack.c.b16 %v381, %v365
    %v606 = vpack.c.b16 %v382, %v366
    %v607 = vpack.c.b16 %v383, %v367
    %v608 = vpack.c.b16 %v384, %v368
    %v609 = vpack.c.b16 %v385, %v369
    %v610 = vpack.c.b16 %v386, %v370
    %v611 = vpack.c.b16 %v387, %v371
    %v612 = vpack.c.b16 %v388, %v372
    %v613 = vpack.c.b16 %v389, %v373
    %v614 = vpack.c.b16 %v390, %v374
    %v615 = vpack.c.b16 %v407, %v391
    %v616 = vpack.c.b16 %v408, %v392
    %v617 = vpack.c.b16 %v409, %v393
    %v618 = vpack.c.b16 %v410, %v394
    %v619 = vpack.c.b16 %v411, %v395
    %v620 = vpack.c.b16 %v412, %v396
    %v621 = vpack.c.b16 %v413, %v397
    %v622 = vpack.c.b16 %v414, %v398
    %v623 = vpack.c.b16 %v415, %v399
    %v624 = vpack.c.b16 %v416, %v400
    %v625 = vpack.c.b16 %v417, %v401
    %v626 = vpack.c.b16 %v418, %v402
    %v627 = vpack.c.b16 %v419, %v403
    %v628 = vpack.c.b16 %v420, %v404
    %v629 = vpack.c.b16 %v421, %v405
    %v630 = vpack.c.b16 %v422, %v406
    %v631 = vpack.c.b16 %v439, %v423
    %v632 = vpack.c.b16 %v440, %v424
    %v633 = vpack.c.b16 %v441, %v425
    %v634 = vpack.c.b16 %v442, %v426
    %v635 = vpack.c.b16 %v443, %v427
    %v636 = vpack.c.b16 %v444, %v428
    %v637 = vpack.c.b16 %v445, %v429
    %v638 = vpack.c.b16 %v446, %v430
    %v639 = vpack.c.b16 %v447, %v431
    %v640 = vpack.c.b16 %v448, %v432
    %v641 = vpack.c.b16 %v449, %v433
    %v642 = vpack.c.b16 %v450, %v434
    %v643 = vpack.c.b16 %v451, %v435
    %v644 = vpack.c.b16 %v452, %v436
    %v645 = vpack.c.b16 %v453, %v437
    %v646 = vpack.c.b16 %v454, %v438
    %v647 = vpack.c.b16 %v471, %v455
    %v648 = vpack.c.b16 %v472, %v456
    %v649 = vpack.c.b16 %v473, %v457
    %v650 = vpack.c.b16 %v474, %v458
    %v651 = vpack.c.b16 %v475, %v459
    %v652 = vpack.c.b16 %v476, %v460
    %v653 = vpack.c.b16 %v477, %v461
    %v654 = vpack.c.b16 %v478, %v462
    %v655 = vpack.c.b16 %v479, %v463
    %v656 = vpack.c.b16 %v480, %v464
    %v657 = vpack.c.b16 %v481, %v465
    %v658 = vpack.c.b16 %v482, %v466
    %v659 = vpack.c.b16 %v483, %v467
    %v660 = vpack.c.b16 %v484, %v468
    %v661 = vpack.c.b16 %v485, %v469
    %v662 = vpack.c.b16 %v486, %v470
    %v663 = vpack.c.b16 %v503, %v487
    %v664 = vpack.c.b16 %v504, %v488
    %v665 = vpack.c.b16 %v505, %v489
    %v666 = vpack.c.b16 %v506, %v490
    %v667 = vpack.c.b16 %v507, %v491
    %v668 = vpack.c.b16 %v508, %v492
    %v669 = vpack.c.b16 %v509, %v493
    %v670 = vpack.c.b16 %v510, %v494
    %v671 = vpack.c.b16 %v511, %v495
    %v672 = vpack.c.b16 %v512, %v496
    %v673 = vpack.c.b16 %v513, %v497
    %v674 = vpack.c.b16 %v514, %v498
    %v675 = vpack.c.b16 %v515, %v499
    %v676 = vpack.c.b16 %v516, %v500
    %v677 = vpack.c.b16 %v517, %v501
    %v678 = vpack.c.b16 %v518, %v502
    %v679 = vpack.c.b16 %v535, %v519
    %v680 = vpack.c.b16 %v536, %v520
    %v681 = vpack.c.b16 %v537, %v521
    %v682 = vpack.c.b16 %v538, %v522
    %v683 = vpack.c.b16 %v539, %v523
    %v684 = vpack.c.b16 %v540, %v524
    %v685 = vpack.c.b16 %v541, %v525
    %v686 = vpack.c.b16 %v542, %v526
    %v687 = vpack.c.b16 %v543, %v527
    %v688 = vpack.c.b16 %v544, %v528
    %v689 = vpack.c.b16 %v545, %v529
    %v690 = vpack.c.b16 %v546, %v530
    %v691 = vpack.c.b16 %v547, %v531
    %v692 = vpack.c.b16 %v548, %v532
    %v693 = vpack.c.b16 %v549, %v533
    %v694 = vpack.c.b16 %v550, %v534
    %v695 = vpack.c.b16 %v567, %v551
    %v696 = vpack.c.b16 %v568, %v552
    %v697 = vpack.c.b16 %v569, %v553
    %v698 = vpack.c.b16 %v570, %v554
    %v699 = vpack.c.b16 %v571, %v555
    %v700 = vpack.c.b16 %v572, %v556
    %v701 = vpack.c.b16 %v573, %v557
    %v702 = vpack.c.b16 %v574, %v558
    %v703 = vpack.c.b16 %v575, %v559
    %v704 = vpack.c.b16 %v576, %v560
    %v705 = vpack.c.b16 %v577, %v561
    %v706 = vpack.c.b16 %v578, %v562
    %v707 = vpack.c.b16 %v579, %v563
    %v708 = vpack.c.b16 %v580, %v564
    %v709 = vpack.c.b16 %v581, %v565
    %v710 = vpack.c.b16 %v582, %v566
    %839 = vmatpush.bf16.msra.mxu0 %v695
    %840 = vmatpush.bf16.msra.mxu0 %v679
    %841 = vmatpush.bf16.msra.mxu0 %v663
    %842 = vmatpush.bf16.msra.mxu0 %v647
    %843 = vmatpush.bf16.msra.mxu0 %v631
    %844 = vmatpush.bf16.msra.mxu0 %v615
    %845 = vmatpush.bf16.msra.mxu0 %v599
    %846 = vmatpush.bf16.msra.mxu0 %v583
    %847 = vmatmul.bf16.gmra.mxu0 %v67
    %v848 = vpop.f32.mrf.mxu0
    %v849 = vadd.f32 0.0, %v848
    %v850 = vpop.f32.mrf.mxu0
    %851 = vdwg.mxu0
    %852 = vmatpush.bf16.msra.mxu0 %v696
    %853 = vmatpush.bf16.msra.mxu0 %v680
    %854 = vmatpush.bf16.msra.mxu0 %v664
    %855 = vmatpush.bf16.msra.mxu0 %v648
    %856 = vmatpush.bf16.msra.mxu0 %v632
    %857 = vmatpush.bf16.msra.mxu0 %v616
    %858 = vmatpush.bf16.msra.mxu0 %v600
    %859 = vmatpush.bf16.msra.mxu0 %v584
    %860 = vmatmul.bf16.gmra.mxu0 %v67
    %v861 = vpop.f32.mrf.mxu0
    %v862 = vadd.f32 0.0, %v861
    %v863 = vpop.f32.mrf.mxu0
    %864 = vdwg.mxu0
    %865 = vmatpush.bf16.msra.mxu0 %v697
    %866 = vmatpush.bf16.msra.mxu0 %v681
    %867 = vmatpush.bf16.msra.mxu0 %v665
    %868 = vmatpush.bf16.msra.mxu0 %v649
    %869 = vmatpush.bf16.msra.mxu0 %v633
    %870 = vmatpush.bf16.msra.mxu0 %v617
    %871 = vmatpush.bf16.msra.mxu0 %v601
    %872 = vmatpush.bf16.msra.mxu0 %v585
    %873 = vmatmul.bf16.gmra.mxu0 %v67
    %v874 = vpop.f32.mrf.mxu0
    %v875 = vadd.f32 0.0, %v874
    %v876 = vpop.f32.mrf.mxu0
    %877 = vdwg.mxu0
    %878 = vmatpush.bf16.msra.mxu0 %v698
    %879 = vmatpush.bf16.msra.mxu0 %v682
    %880 = vmatpush.bf16.msra.mxu0 %v666
    %881 = vmatpush.bf16.msra.mxu0 %v650
    %882 = vmatpush.bf16.msra.mxu0 %v634
    %883 = vmatpush.bf16.msra.mxu0 %v618
    %884 = vmatpush.bf16.msra.mxu0 %v602
    %885 = vmatpush.bf16.msra.mxu0 %v586
    %886 = vmatmul.bf16.gmra.mxu0 %v67
    %v887 = vpop.f32.mrf.mxu0
    %v888 = vadd.f32 0.0, %v887
    %v889 = vpop.f32.mrf.mxu0
    %890 = vdwg.mxu0
    %891 = vmatpush.bf16.msra.mxu0 %v699
    %892 = vmatpush.bf16.msra.mxu0 %v683
    %893 = vmatpush.bf16.msra.mxu0 %v667
    %894 = vmatpush.bf16.msra.mxu0 %v651
    %895 = vmatpush.bf16.msra.mxu0 %v635
    %896 = vmatpush.bf16.msra.mxu0 %v619
    %897 = vmatpush.bf16.msra.mxu0 %v603
    %898 = vmatpush.bf16.msra.mxu0 %v587
    %899 = vmatmul.bf16.gmra.mxu0 %v67
    %v900 = vpop.f32.mrf.mxu0
    %v901 = vadd.f32 0.0, %v900
    %v902 = vpop.f32.mrf.mxu0
    %903 = vdwg.mxu0
    %904 = vmatpush.bf16.msra.mxu0 %v700
    %905 = vmatpush.bf16.msra.mxu0 %v684
    %906 = vmatpush.bf16.msra.mxu0 %v668
    %907 = vmatpush.bf16.msra.mxu0 %v652
    %908 = vmatpush.bf16.msra.mxu0 %v636
    %909 = vmatpush.bf16.msra.mxu0 %v620
    %910 = vmatpush.bf16.msra.mxu0 %v604
    %911 = vmatpush.bf16.msra.mxu0 %v588
    %912 = vmatmul.bf16.gmra.mxu0 %v67
    %v913 = vpop.f32.mrf.mxu0
    %v914 = vadd.f32 0.0, %v913
    %v915 = vpop.f32.mrf.mxu0
    %916 = vdwg.mxu0
    %917 = vmatpush.bf16.msra.mxu0 %v701
    %918 = vmatpush.bf16.msra.mxu0 %v685
    %919 = vmatpush.bf16.msra.mxu0 %v669
    %920 = vmatpush.bf16.msra.mxu0 %v653
    %921 = vmatpush.bf16.msra.mxu0 %v637
    %922 = vmatpush.bf16.msra.mxu0 %v621
    %923 = vmatpush.bf16.msra.mxu0 %v605
    %924 = vmatpush.bf16.msra.mxu0 %v589
    %925 = vmatmul.bf16.gmra.mxu0 %v67
    %v926 = vpop.f32.mrf.mxu0
    %v927 = vadd.f32 0.0, %v926
    %v928 = vpop.f32.mrf.mxu0
    %929 = vdwg.mxu0
    %930 = vmatpush.bf16.msra.mxu0 %v702
    %931 = vmatpush.bf16.msra.mxu0 %v686
    %932 = vmatpush.bf16.msra.mxu0 %v670
    %933 = vmatpush.bf16.msra.mxu0 %v654
    %934 = vmatpush.bf16.msra.mxu0 %v638
    %935 = vmatpush.bf16.msra.mxu0 %v622
    %936 = vmatpush.bf16.msra.mxu0 %v606
    %937 = vmatpush.bf16.msra.mxu0 %v590
    %938 = vmatmul.bf16.gmra.mxu0 %v67
    %v939 = vpop.f32.mrf.mxu0
    %v940 = vadd.f32 0.0, %v939
    %v941 = vpop.f32.mrf.mxu0
    %942 = vdwg.mxu0
    %943 = vmatpush.bf16.msra.mxu0 %v703
    %944 = vmatpush.bf16.msra.mxu0 %v687
    %945 = vmatpush.bf16.msra.mxu0 %v671
    %946 = vmatpush.bf16.msra.mxu0 %v655
    %947 = vmatpush.bf16.msra.mxu0 %v639
    %948 = vmatpush.bf16.msra.mxu0 %v623
    %949 = vmatpush.bf16.msra.mxu0 %v607
    %950 = vmatpush.bf16.msra.mxu0 %v591
    %951 = vmatmul.bf16.gmra.mxu0 %v67
    %v952 = vpop.f32.mrf.mxu0
    %v953 = vadd.f32 0.0, %v952
    %v954 = vpop.f32.mrf.mxu0
    %955 = vdwg.mxu0
    %956 = vmatpush.bf16.msra.mxu0 %v704
    %957 = vmatpush.bf16.msra.mxu0 %v688
    %958 = vmatpush.bf16.msra.mxu0 %v672
    %959 = vmatpush.bf16.msra.mxu0 %v656
    %960 = vmatpush.bf16.msra.mxu0 %v640
    %961 = vmatpush.bf16.msra.mxu0 %v624
    %962 = vmatpush.bf16.msra.mxu0 %v608
    %963 = vmatpush.bf16.msra.mxu0 %v592
    %964 = vmatmul.bf16.gmra.mxu0 %v67
    %v965 = vpop.f32.mrf.mxu0
    %v966 = vadd.f32 0.0, %v965
    %v967 = vpop.f32.mrf.mxu0
    %968 = vdwg.mxu0
    %969 = vmatpush.bf16.msra.mxu0 %v705
    %970 = vmatpush.bf16.msra.mxu0 %v689
    %971 = vmatpush.bf16.msra.mxu0 %v673
    %972 = vmatpush.bf16.msra.mxu0 %v657
    %973 = vmatpush.bf16.msra.mxu0 %v641
    %974 = vmatpush.bf16.msra.mxu0 %v625
    %975 = vmatpush.bf16.msra.mxu0 %v609
    %976 = vmatpush.bf16.msra.mxu0 %v593
    %977 = vmatmul.bf16.gmra.mxu0 %v67
    %v978 = vpop.f32.mrf.mxu0
    %v979 = vadd.f32 0.0, %v978
    %v980 = vpop.f32.mrf.mxu0
    %981 = vdwg.mxu0
    %982 = vmatpush.bf16.msra.mxu0 %v706
    %983 = vmatpush.bf16.msra.mxu0 %v690
    %984 = vmatpush.bf16.msra.mxu0 %v674
    %985 = vmatpush.bf16.msra.mxu0 %v658
    %986 = vmatpush.bf16.msra.mxu0 %v642
    %987 = vmatpush.bf16.msra.mxu0 %v626
    %988 = vmatpush.bf16.msra.mxu0 %v610
    %989 = vmatpush.bf16.msra.mxu0 %v594
    %990 = vmatmul.bf16.gmra.mxu0 %v67
    %v991 = vpop.f32.mrf.mxu0
    %v992 = vadd.f32 0.0, %v991
    %v993 = vpop.f32.mrf.mxu0
    %994 = vdwg.mxu0
    %995 = vmatpush.bf16.msra.mxu0 %v707
    %996 = vmatpush.bf16.msra.mxu0 %v691
    %997 = vmatpush.bf16.msra.mxu0 %v675
    %998 = vmatpush.bf16.msra.mxu0 %v659
    %999 = vmatpush.bf16.msra.mxu0 %v643
    %1000 = vmatpush.bf16.msra.mxu0 %v627
    %1001 = vmatpush.bf16.msra.mxu0 %v611
    %1002 = vmatpush.bf16.msra.mxu0 %v595
    %1003 = vmatmul.bf16.gmra.mxu0 %v67
    %v1004 = vpop.f32.mrf.mxu0
    %v1005 = vadd.f32 0.0, %v1004
    %v1006 = vpop.f32.mrf.mxu0
    %1007 = vdwg.mxu0
    %1008 = vmatpush.bf16.msra.mxu0 %v708
    %1009 = vmatpush.bf16.msra.mxu0 %v692
    %1010 = vmatpush.bf16.msra.mxu0 %v676
    %1011 = vmatpush.bf16.msra.mxu0 %v660
    %1012 = vmatpush.bf16.msra.mxu0 %v644
    %1013 = vmatpush.bf16.msra.mxu0 %v628
    %1014 = vmatpush.bf16.msra.mxu0 %v612
    %1015 = vmatpush.bf16.msra.mxu0 %v596
    %1016 = vmatmul.bf16.gmra.mxu0 %v67
    %v1017 = vpop.f32.mrf.mxu0
    %v1018 = vadd.f32 0.0, %v1017
    %v1019 = vpop.f32.mrf.mxu0
    %1020 = vdwg.mxu0
    %1021 = vmatpush.bf16.msra.mxu0 %v709
    %1022 = vmatpush.bf16.msra.mxu0 %v693
    %1023 = vmatpush.bf16.msra.mxu0 %v677
    %1024 = vmatpush.bf16.msra.mxu0 %v661
    %1025 = vmatpush.bf16.msra.mxu0 %v645
    %1026 = vmatpush.bf16.msra.mxu0 %v629
    %1027 = vmatpush.bf16.msra.mxu0 %v613
    %1028 = vmatpush.bf16.msra.mxu0 %v597
    %1029 = vmatmul.bf16.gmra.mxu0 %v67
    %v1030 = vpop.f32.mrf.mxu0
    %v1031 = vadd.f32 0.0, %v1030
    %v1032 = vpop.f32.mrf.mxu0
    %1033 = vdwg.mxu0
    %1034 = vmatpush.bf16.msra.mxu0 %v710
    %1035 = vmatpush.bf16.msra.mxu0 %v694
    %1036 = vmatpush.bf16.msra.mxu0 %v678
    %1037 = vmatpush.bf16.msra.mxu0 %v662
    %1038 = vmatpush.bf16.msra.mxu0 %v646
    %1039 = vmatpush.bf16.msra.mxu0 %v630
    %1040 = vmatpush.bf16.msra.mxu0 %v614
    %1041 = vmatpush.bf16.msra.mxu0 %v598
    %1042 = vmatmul.bf16.gmra.mxu0 %v67
    %v1043 = vpop.f32.mrf.mxu0
    %v1044 = vadd.f32 0.0, %v1043
    %v1045 = vpop.f32.mrf.mxu0
    %1046 = vdwg.mxu0
    %1047 = vmatpush.bf16.msra.mxu0 %v695
    %1048 = vmatpush.bf16.msra.mxu0 %v679
    %1049 = vmatpush.bf16.msra.mxu0 %v663
    %1050 = vmatpush.bf16.msra.mxu0 %v647
    %1051 = vmatpush.bf16.msra.mxu0 %v631
    %1052 = vmatpush.bf16.msra.mxu0 %v615
    %1053 = vmatpush.bf16.msra.mxu0 %v599
    %1054 = vmatpush.bf16.msra.mxu0 %v583
    %1055 = vmatmul.bf16.gmra.mxu0 %v64
    %v1056 = vpop.f32.mrf.mxu0
    %v1057 = vadd.f32 %v849, %v1056
    %v1058 = vpop.f32.mrf.mxu0
    %1059 = vdwg.mxu0
    %1060 = vmatpush.bf16.msra.mxu0 %v696
    %1061 = vmatpush.bf16.msra.mxu0 %v680
    %1062 = vmatpush.bf16.msra.mxu0 %v664
    %1063 = vmatpush.bf16.msra.mxu0 %v648
    %1064 = vmatpush.bf16.msra.mxu0 %v632
    %1065 = vmatpush.bf16.msra.mxu0 %v616
    %1066 = vmatpush.bf16.msra.mxu0 %v600
    %1067 = vmatpush.bf16.msra.mxu0 %v584
    %1068 = vmatmul.bf16.gmra.mxu0 %v64
    %v1069 = vpop.f32.mrf.mxu0
    %v1070 = vadd.f32 %v862, %v1069
    %v1071 = vpop.f32.mrf.mxu0
    %1072 = vdwg.mxu0
    %1073 = vmatpush.bf16.msra.mxu0 %v697
    %1074 = vmatpush.bf16.msra.mxu0 %v681
    %1075 = vmatpush.bf16.msra.mxu0 %v665
    %1076 = vmatpush.bf16.msra.mxu0 %v649
    %1077 = vmatpush.bf16.msra.mxu0 %v633
    %1078 = vmatpush.bf16.msra.mxu0 %v617
    %1079 = vmatpush.bf16.msra.mxu0 %v601
    %1080 = vmatpush.bf16.msra.mxu0 %v585
    %1081 = vmatmul.bf16.gmra.mxu0 %v64
    %v1082 = vpop.f32.mrf.mxu0
    %v1083 = vadd.f32 %v875, %v1082
    %v1084 = vpop.f32.mrf.mxu0
    %1085 = vdwg.mxu0
    %1086 = vmatpush.bf16.msra.mxu0 %v698
    %1087 = vmatpush.bf16.msra.mxu0 %v682
    %1088 = vmatpush.bf16.msra.mxu0 %v666
    %1089 = vmatpush.bf16.msra.mxu0 %v650
    %1090 = vmatpush.bf16.msra.mxu0 %v634
    %1091 = vmatpush.bf16.msra.mxu0 %v618
    %1092 = vmatpush.bf16.msra.mxu0 %v602
    %1093 = vmatpush.bf16.msra.mxu0 %v586
    %1094 = vmatmul.bf16.gmra.mxu0 %v64
    %v1095 = vpop.f32.mrf.mxu0
    %v1096 = vadd.f32 %v888, %v1095
    %v1097 = vpop.f32.mrf.mxu0
    %1098 = vdwg.mxu0
    %1099 = vmatpush.bf16.msra.mxu0 %v699
    %1100 = vmatpush.bf16.msra.mxu0 %v683
    %1101 = vmatpush.bf16.msra.mxu0 %v667
    %1102 = vmatpush.bf16.msra.mxu0 %v651
    %1103 = vmatpush.bf16.msra.mxu0 %v635
    %1104 = vmatpush.bf16.msra.mxu0 %v619
    %1105 = vmatpush.bf16.msra.mxu0 %v603
    %1106 = vmatpush.bf16.msra.mxu0 %v587
    %1107 = vmatmul.bf16.gmra.mxu0 %v64
    %v1108 = vpop.f32.mrf.mxu0
    %v1109 = vadd.f32 %v901, %v1108
    %v1110 = vpop.f32.mrf.mxu0
    %1111 = vdwg.mxu0
    %1112 = vmatpush.bf16.msra.mxu0 %v700
    %1113 = vmatpush.bf16.msra.mxu0 %v684
    %1114 = vmatpush.bf16.msra.mxu0 %v668
    %1115 = vmatpush.bf16.msra.mxu0 %v652
    %1116 = vmatpush.bf16.msra.mxu0 %v636
    %1117 = vmatpush.bf16.msra.mxu0 %v620
    %1118 = vmatpush.bf16.msra.mxu0 %v604
    %1119 = vmatpush.bf16.msra.mxu0 %v588
    %1120 = vmatmul.bf16.gmra.mxu0 %v64
    %v1121 = vpop.f32.mrf.mxu0
    %v1122 = vadd.f32 %v914, %v1121
    %v1123 = vpop.f32.mrf.mxu0
    %1124 = vdwg.mxu0
    %1125 = vmatpush.bf16.msra.mxu0 %v701
    %1126 = vmatpush.bf16.msra.mxu0 %v685
    %1127 = vmatpush.bf16.msra.mxu0 %v669
    %1128 = vmatpush.bf16.msra.mxu0 %v653
    %1129 = vmatpush.bf16.msra.mxu0 %v637
    %1130 = vmatpush.bf16.msra.mxu0 %v621
    %1131 = vmatpush.bf16.msra.mxu0 %v605
    %1132 = vmatpush.bf16.msra.mxu0 %v589
    %1133 = vmatmul.bf16.gmra.mxu0 %v64
    %v1134 = vpop.f32.mrf.mxu0
    %v1135 = vadd.f32 %v927, %v1134
    %v1136 = vpop.f32.mrf.mxu0
    %1137 = vdwg.mxu0
    %1138 = vmatpush.bf16.msra.mxu0 %v702
    %1139 = vmatpush.bf16.msra.mxu0 %v686
    %1140 = vmatpush.bf16.msra.mxu0 %v670
    %1141 = vmatpush.bf16.msra.mxu0 %v654
    %1142 = vmatpush.bf16.msra.mxu0 %v638
    %1143 = vmatpush.bf16.msra.mxu0 %v622
    %1144 = vmatpush.bf16.msra.mxu0 %v606
    %1145 = vmatpush.bf16.msra.mxu0 %v590
    %1146 = vmatmul.bf16.gmra.mxu0 %v64
    %v1147 = vpop.f32.mrf.mxu0
    %v1148 = vadd.f32 %v940, %v1147
    %v1149 = vpop.f32.mrf.mxu0
    %1150 = vdwg.mxu0
    %1151 = vmatpush.bf16.msra.mxu0 %v703
    %1152 = vmatpush.bf16.msra.mxu0 %v687
    %1153 = vmatpush.bf16.msra.mxu0 %v671
    %1154 = vmatpush.bf16.msra.mxu0 %v655
    %1155 = vmatpush.bf16.msra.mxu0 %v639
    %1156 = vmatpush.bf16.msra.mxu0 %v623
    %1157 = vmatpush.bf16.msra.mxu0 %v607
    %1158 = vmatpush.bf16.msra.mxu0 %v591
    %1159 = vmatmul.bf16.gmra.mxu0 %v64
    %v1160 = vpop.f32.mrf.mxu0
    %v1161 = vadd.f32 %v953, %v1160
    %v1162 = vpop.f32.mrf.mxu0
    %1163 = vdwg.mxu0
    %1164 = vmatpush.bf16.msra.mxu0 %v704
    %1165 = vmatpush.bf16.msra.mxu0 %v688
    %1166 = vmatpush.bf16.msra.mxu0 %v672
    %1167 = vmatpush.bf16.msra.mxu0 %v656
    %1168 = vmatpush.bf16.msra.mxu0 %v640
    %1169 = vmatpush.bf16.msra.mxu0 %v624
    %1170 = vmatpush.bf16.msra.mxu0 %v608
    %1171 = vmatpush.bf16.msra.mxu0 %v592
    %1172 = vmatmul.bf16.gmra.mxu0 %v64
    %v1173 = vpop.f32.mrf.mxu0
    %v1174 = vadd.f32 %v966, %v1173
    %v1175 = vpop.f32.mrf.mxu0
    %1176 = vdwg.mxu0
    %1177 = vmatpush.bf16.msra.mxu0 %v705
    %1178 = vmatpush.bf16.msra.mxu0 %v689
    %1179 = vmatpush.bf16.msra.mxu0 %v673
    %1180 = vmatpush.bf16.msra.mxu0 %v657
    %1181 = vmatpush.bf16.msra.mxu0 %v641
    %1182 = vmatpush.bf16.msra.mxu0 %v625
    %1183 = vmatpush.bf16.msra.mxu0 %v609
    %1184 = vmatpush.bf16.msra.mxu0 %v593
    %1185 = vmatmul.bf16.gmra.mxu0 %v64
    %v1186 = vpop.f32.mrf.mxu0
    %v1187 = vadd.f32 %v979, %v1186
    %v1188 = vpop.f32.mrf.mxu0
    %1189 = vdwg.mxu0
    %1190 = vmatpush.bf16.msra.mxu0 %v706
    %1191 = vmatpush.bf16.msra.mxu0 %v690
    %1192 = vmatpush.bf16.msra.mxu0 %v674
    %1193 = vmatpush.bf16.msra.mxu0 %v658
    %1194 = vmatpush.bf16.msra.mxu0 %v642
    %1195 = vmatpush.bf16.msra.mxu0 %v626
    %1196 = vmatpush.bf16.msra.mxu0 %v610
    %1197 = vmatpush.bf16.msra.mxu0 %v594
    %1198 = vmatmul.bf16.gmra.mxu0 %v64
    %v1199 = vpop.f32.mrf.mxu0
    %v1200 = vadd.f32 %v992, %v1199
    %v1201 = vpop.f32.mrf.mxu0
    %1202 = vdwg.mxu0
    %1203 = vmatpush.bf16.msra.mxu0 %v707
    %1204 = vmatpush.bf16.msra.mxu0 %v691
    %1205 = vmatpush.bf16.msra.mxu0 %v675
    %1206 = vmatpush.bf16.msra.mxu0 %v659
    %1207 = vmatpush.bf16.msra.mxu0 %v643
    %1208 = vmatpush.bf16.msra.mxu0 %v627
    %1209 = vmatpush.bf16.msra.mxu0 %v611
    %1210 = vmatpush.bf16.msra.mxu0 %v595
    %1211 = vmatmul.bf16.gmra.mxu0 %v64
    %v1212 = vpop.f32.mrf.mxu0
    %v1213 = vadd.f32 %v1005, %v1212
    %v1214 = vpop.f32.mrf.mxu0
    %1215 = vdwg.mxu0
    %1216 = vmatpush.bf16.msra.mxu0 %v708
    %1217 = vmatpush.bf16.msra.mxu0 %v692
    %1218 = vmatpush.bf16.msra.mxu0 %v676
    %1219 = vmatpush.bf16.msra.mxu0 %v660
    %1220 = vmatpush.bf16.msra.mxu0 %v644
    %1221 = vmatpush.bf16.msra.mxu0 %v628
    %1222 = vmatpush.bf16.msra.mxu0 %v612
    %1223 = vmatpush.bf16.msra.mxu0 %v596
    %1224 = vmatmul.bf16.gmra.mxu0 %v64
    %v1225 = vpop.f32.mrf.mxu0
    %v1226 = vadd.f32 %v1018, %v1225
    %v1227 = vpop.f32.mrf.mxu0
    %1228 = vdwg.mxu0
    %1229 = vmatpush.bf16.msra.mxu0 %v709
    %1230 = vmatpush.bf16.msra.mxu0 %v693
    %1231 = vmatpush.bf16.msra.mxu0 %v677
    %1232 = vmatpush.bf16.msra.mxu0 %v661
    %1233 = vmatpush.bf16.msra.mxu0 %v645
    %1234 = vmatpush.bf16.msra.mxu0 %v629
    %1235 = vmatpush.bf16.msra.mxu0 %v613
    %1236 = vmatpush.bf16.msra.mxu0 %v597
    %1237 = vmatmul.bf16.gmra.mxu0 %v64
    %v1238 = vpop.f32.mrf.mxu0
    %v1239 = vadd.f32 %v1031, %v1238
    %v1240 = vpop.f32.mrf.mxu0
    %1241 = vdwg.mxu0
    %1242 = vmatpush.bf16.msra.mxu0 %v710
    %1243 = vmatpush.bf16.msra.mxu0 %v694
    %1244 = vmatpush.bf16.msra.mxu0 %v678
    %1245 = vmatpush.bf16.msra.mxu0 %v662
    %1246 = vmatpush.bf16.msra.mxu0 %v646
    %1247 = vmatpush.bf16.msra.mxu0 %v630
    %1248 = vmatpush.bf16.msra.mxu0 %v614
    %1249 = vmatpush.bf16.msra.mxu0 %v598
    %1250 = vmatmul.bf16.gmra.mxu0 %v64
    %v1251 = vpop.f32.mrf.mxu0
    %v1252 = vadd.f32 %v1044, %v1251
    %v1253 = vpop.f32.mrf.mxu0
    %1254 = vdwg.mxu0
    %1255 = vmatpush.bf16.msra.mxu0 %v695
    %1256 = vmatpush.bf16.msra.mxu0 %v679
    %1257 = vmatpush.bf16.msra.mxu0 %v663
    %1258 = vmatpush.bf16.msra.mxu0 %v647
    %1259 = vmatpush.bf16.msra.mxu0 %v631
    %1260 = vmatpush.bf16.msra.mxu0 %v615
    %1261 = vmatpush.bf16.msra.mxu0 %v599
    %1262 = vmatpush.bf16.msra.mxu0 %v583
    %1263 = vmatmul.bf16.gmra.mxu0 %v70
    %v1264 = vpop.f32.mrf.mxu0
    %v1265 = vadd.f32 0.0, %v1264
    %v1266 = vpop.f32.mrf.mxu0
    %1267 = vdwg.mxu0
    %1268 = vmatpush.bf16.msra.mxu0 %v696
    %1269 = vmatpush.bf16.msra.mxu0 %v680
    %1270 = vmatpush.bf16.msra.mxu0 %v664
    %1271 = vmatpush.bf16.msra.mxu0 %v648
    %1272 = vmatpush.bf16.msra.mxu0 %v632
    %1273 = vmatpush.bf16.msra.mxu0 %v616
    %1274 = vmatpush.bf16.msra.mxu0 %v600
    %1275 = vmatpush.bf16.msra.mxu0 %v584
    %1276 = vmatmul.bf16.gmra.mxu0 %v70
    %v1277 = vpop.f32.mrf.mxu0
    %v1278 = vadd.f32 0.0, %v1277
    %v1279 = vpop.f32.mrf.mxu0
    %1280 = vdwg.mxu0
    %1281 = vmatpush.bf16.msra.mxu0 %v697
    %1282 = vmatpush.bf16.msra.mxu0 %v681
    %1283 = vmatpush.bf16.msra.mxu0 %v665
    %1284 = vmatpush.bf16.msra.mxu0 %v649
    %1285 = vmatpush.bf16.msra.mxu0 %v633
    %1286 = vmatpush.bf16.msra.mxu0 %v617
    %1287 = vmatpush.bf16.msra.mxu0 %v601
    %1288 = vmatpush.bf16.msra.mxu0 %v585
    %1289 = vmatmul.bf16.gmra.mxu0 %v70
    %v1290 = vpop.f32.mrf.mxu0
    %v1291 = vadd.f32 0.0, %v1290
    %v1292 = vpop.f32.mrf.mxu0
    %1293 = vdwg.mxu0
    %1294 = vmatpush.bf16.msra.mxu0 %v698
    %1295 = vmatpush.bf16.msra.mxu0 %v682
    %1296 = vmatpush.bf16.msra.mxu0 %v666
    %1297 = vmatpush.bf16.msra.mxu0 %v650
    %1298 = vmatpush.bf16.msra.mxu0 %v634
    %1299 = vmatpush.bf16.msra.mxu0 %v618
    %1300 = vmatpush.bf16.msra.mxu0 %v602
    %1301 = vmatpush.bf16.msra.mxu0 %v586
    %1302 = vmatmul.bf16.gmra.mxu0 %v70
    %v1303 = vpop.f32.mrf.mxu0
    %v1304 = vadd.f32 0.0, %v1303
    %v1305 = vpop.f32.mrf.mxu0
    %1306 = vdwg.mxu0
    %1307 = vmatpush.bf16.msra.mxu0 %v699
    %1308 = vmatpush.bf16.msra.mxu0 %v683
    %1309 = vmatpush.bf16.msra.mxu0 %v667
    %1310 = vmatpush.bf16.msra.mxu0 %v651
    %1311 = vmatpush.bf16.msra.mxu0 %v635
    %1312 = vmatpush.bf16.msra.mxu0 %v619
    %1313 = vmatpush.bf16.msra.mxu0 %v603
    %1314 = vmatpush.bf16.msra.mxu0 %v587
    %1315 = vmatmul.bf16.gmra.mxu0 %v70
    %v1316 = vpop.f32.mrf.mxu0
    %v1317 = vadd.f32 0.0, %v1316
    %v1318 = vpop.f32.mrf.mxu0
    %1319 = vdwg.mxu0
    %1320 = vmatpush.bf16.msra.mxu0 %v700
    %1321 = vmatpush.bf16.msra.mxu0 %v684
    %1322 = vmatpush.bf16.msra.mxu0 %v668
    %1323 = vmatpush.bf16.msra.mxu0 %v652
    %1324 = vmatpush.bf16.msra.mxu0 %v636
    %1325 = vmatpush.bf16.msra.mxu0 %v620
    %1326 = vmatpush.bf16.msra.mxu0 %v604
    %1327 = vmatpush.bf16.msra.mxu0 %v588
    %1328 = vmatmul.bf16.gmra.mxu0 %v70
    %v1329 = vpop.f32.mrf.mxu0
    %v1330 = vadd.f32 0.0, %v1329
    %v1331 = vpop.f32.mrf.mxu0
    %1332 = vdwg.mxu0
    %1333 = vmatpush.bf16.msra.mxu0 %v701
    %1334 = vmatpush.bf16.msra.mxu0 %v685
    %1335 = vmatpush.bf16.msra.mxu0 %v669
    %1336 = vmatpush.bf16.msra.mxu0 %v653
    %1337 = vmatpush.bf16.msra.mxu0 %v637
    %1338 = vmatpush.bf16.msra.mxu0 %v621
    %1339 = vmatpush.bf16.msra.mxu0 %v605
    %1340 = vmatpush.bf16.msra.mxu0 %v589
    %1341 = vmatmul.bf16.gmra.mxu0 %v70
    %v1342 = vpop.f32.mrf.mxu0
    %v1343 = vadd.f32 0.0, %v1342
    %v1344 = vpop.f32.mrf.mxu0
    %1345 = vdwg.mxu0
    %1346 = vmatpush.bf16.msra.mxu0 %v702
    %1347 = vmatpush.bf16.msra.mxu0 %v686
    %1348 = vmatpush.bf16.msra.mxu0 %v670
    %1349 = vmatpush.bf16.msra.mxu0 %v654
    %1350 = vmatpush.bf16.msra.mxu0 %v638
    %1351 = vmatpush.bf16.msra.mxu0 %v622
    %1352 = vmatpush.bf16.msra.mxu0 %v606
    %1353 = vmatpush.bf16.msra.mxu0 %v590
    %1354 = vmatmul.bf16.gmra.mxu0 %v70
    %v1355 = vpop.f32.mrf.mxu0
    %v1356 = vadd.f32 0.0, %v1355
    %v1357 = vpop.f32.mrf.mxu0
    %1358 = vdwg.mxu0
    %1359 = vmatpush.bf16.msra.mxu0 %v703
    %1360 = vmatpush.bf16.msra.mxu0 %v687
    %1361 = vmatpush.bf16.msra.mxu0 %v671
    %1362 = vmatpush.bf16.msra.mxu0 %v655
    %1363 = vmatpush.bf16.msra.mxu0 %v639
    %1364 = vmatpush.bf16.msra.mxu0 %v623
    %1365 = vmatpush.bf16.msra.mxu0 %v607
    %1366 = vmatpush.bf16.msra.mxu0 %v591
    %1367 = vmatmul.bf16.gmra.mxu0 %v70
    %v1368 = vpop.f32.mrf.mxu0
    %v1369 = vadd.f32 0.0, %v1368
    %v1370 = vpop.f32.mrf.mxu0
    %1371 = vdwg.mxu0
    %1372 = vmatpush.bf16.msra.mxu0 %v704
    %1373 = vmatpush.bf16.msra.mxu0 %v688
    %1374 = vmatpush.bf16.msra.mxu0 %v672
    %1375 = vmatpush.bf16.msra.mxu0 %v656
    %1376 = vmatpush.bf16.msra.mxu0 %v640
    %1377 = vmatpush.bf16.msra.mxu0 %v624
    %1378 = vmatpush.bf16.msra.mxu0 %v608
    %1379 = vmatpush.bf16.msra.mxu0 %v592
    %1380 = vmatmul.bf16.gmra.mxu0 %v70
    %v1381 = vpop.f32.mrf.mxu0
    %v1382 = vadd.f32 0.0, %v1381
    %v1383 = vpop.f32.mrf.mxu0
    %1384 = vdwg.mxu0
    %1385 = vmatpush.bf16.msra.mxu0 %v705
    %1386 = vmatpush.bf16.msra.mxu0 %v689
    %1387 = vmatpush.bf16.msra.mxu0 %v673
    %1388 = vmatpush.bf16.msra.mxu0 %v657
    %1389 = vmatpush.bf16.msra.mxu0 %v641
    %1390 = vmatpush.bf16.msra.mxu0 %v625
    %1391 = vmatpush.bf16.msra.mxu0 %v609
    %1392 = vmatpush.bf16.msra.mxu0 %v593
    %1393 = vmatmul.bf16.gmra.mxu0 %v70
    %v1394 = vpop.f32.mrf.mxu0
    %v1395 = vadd.f32 0.0, %v1394
    %v1396 = vpop.f32.mrf.mxu0
    %1397 = vdwg.mxu0
    %1398 = vmatpush.bf16.msra.mxu0 %v706
    %1399 = vmatpush.bf16.msra.mxu0 %v690
    %1400 = vmatpush.bf16.msra.mxu0 %v674
    %1401 = vmatpush.bf16.msra.mxu0 %v658
    %1402 = vmatpush.bf16.msra.mxu0 %v642
    %1403 = vmatpush.bf16.msra.mxu0 %v626
    %1404 = vmatpush.bf16.msra.mxu0 %v610
    %1405 = vmatpush.bf16.msra.mxu0 %v594
    %1406 = vmatmul.bf16.gmra.mxu0 %v70
    %v1407 = vpop.f32.mrf.mxu0
    %v1408 = vadd.f32 0.0, %v1407
    %v1409 = vpop.f32.mrf.mxu0
    %1410 = vdwg.mxu0
    %1411 = vmatpush.bf16.msra.mxu0 %v707
    %1412 = vmatpush.bf16.msra.mxu0 %v691
    %1413 = vmatpush.bf16.msra.mxu0 %v675
    %1414 = vmatpush.bf16.msra.mxu0 %v659
    %1415 = vmatpush.bf16.msra.mxu0 %v643
    %1416 = vmatpush.bf16.msra.mxu0 %v627
    %1417 = vmatpush.bf16.msra.mxu0 %v611
    %1418 = vmatpush.bf16.msra.mxu0 %v595
    %1419 = vmatmul.bf16.gmra.mxu0 %v70
    %v1420 = vpop.f32.mrf.mxu0
    %v1421 = vadd.f32 0.0, %v1420
    %v1422 = vpop.f32.mrf.mxu0
    %1423 = vdwg.mxu0
    %1424 = vmatpush.bf16.msra.mxu0 %v708
    %1425 = vmatpush.bf16.msra.mxu0 %v692
    %1426 = vmatpush.bf16.msra.mxu0 %v676
    %1427 = vmatpush.bf16.msra.mxu0 %v660
    %1428 = vmatpush.bf16.msra.mxu0 %v644
    %1429 = vmatpush.bf16.msra.mxu0 %v628
    %1430 = vmatpush.bf16.msra.mxu0 %v612
    %1431 = vmatpush.bf16.msra.mxu0 %v596
    %1432 = vmatmul.bf16.gmra.mxu0 %v70
    %v1433 = vpop.f32.mrf.mxu0
    %v1434 = vadd.f32 0.0, %v1433
    %v1435 = vpop.f32.mrf.mxu0
    %1436 = vdwg.mxu0
    %1437 = vmatpush.bf16.msra.mxu0 %v709
    %1438 = vmatpush.bf16.msra.mxu0 %v693
    %1439 = vmatpush.bf16.msra.mxu0 %v677
    %1440 = vmatpush.bf16.msra.mxu0 %v661
    %1441 = vmatpush.bf16.msra.mxu0 %v645
    %1442 = vmatpush.bf16.msra.mxu0 %v629
    %1443 = vmatpush.bf16.msra.mxu0 %v613
    %1444 = vmatpush.bf16.msra.mxu0 %v597
    %1445 = vmatmul.bf16.gmra.mxu0 %v70
    %v1446 = vpop.f32.mrf.mxu0
    %v1447 = vadd.f32 0.0, %v1446
    %v1448 = vpop.f32.mrf.mxu0
    %1449 = vdwg.mxu0
    %1450 = vmatpush.bf16.msra.mxu0 %v710
    %1451 = vmatpush.bf16.msra.mxu0 %v694
    %1452 = vmatpush.bf16.msra.mxu0 %v678
    %1453 = vmatpush.bf16.msra.mxu0 %v662
    %1454 = vmatpush.bf16.msra.mxu0 %v646
    %1455 = vmatpush.bf16.msra.mxu0 %v630
    %1456 = vmatpush.bf16.msra.mxu0 %v614
    %1457 = vmatpush.bf16.msra.mxu0 %v598
    %1458 = vmatmul.bf16.gmra.mxu0 %v70
    %v1459 = vpop.f32.mrf.mxu0
    %v1460 = vadd.f32 0.0, %v1459
    %v1461 = vpop.f32.mrf.mxu0
    %1462 = vdwg.mxu0
    %v1463 = vadd.f32 %v1057, %v1265
    %v1464 = vadd.f32 %v1070, %v1278
    %v1465 = vadd.f32 %v1083, %v1291
    %v1466 = vadd.f32 %v1096, %v1304
    %v1467 = vadd.f32 %v1109, %v1317
    %v1468 = vadd.f32 %v1122, %v1330
    %v1469 = vadd.f32 %v1135, %v1343
    %v1470 = vadd.f32 %v1148, %v1356
    %v1471 = vadd.f32 %v1161, %v1369
    %v1472 = vadd.f32 %v1174, %v1382
    %v1473 = vadd.f32 %v1187, %v1395
    %v1474 = vadd.f32 %v1200, %v1408
    %v1475 = vadd.f32 %v1213, %v1421
    %v1476 = vadd.f32 %v1226, %v1434
    %v1477 = vadd.f32 %v1239, %v1447
    %v1478 = vadd.f32 %v1252, %v1460
    %v1479 = vld [vmem:[#allocation3] sm:$0xff]
    %v1480 = vld [vmem:[#allocation3 + $0x8] sm:$0xff]
    %v1483 = vperm.slane %v1479, 0
    %v1484 = vperm.slane %v1479, 1
    %v1485 = vperm.slane %v1479, 2
    %v1486 = vperm.slane %v1479, 3
    %v1487 = vperm.slane %v1479, 4
    %v1488 = vperm.slane %v1479, 5
    %v1489 = vperm.slane %v1479, 6
    %v1490 = vperm.slane %v1479, 7
    %v1491 = vperm.slane %v1480, 0
    %v1492 = vperm.slane %v1480, 1
    %v1493 = vperm.slane %v1480, 2
    %v1494 = vperm.slane %v1480, 3
    %v1495 = vperm.slane %v1480, 4
    %v1496 = vperm.slane %v1480, 5
    %v1497 = vperm.slane %v1480, 6
    %v1498 = vperm.slane %v1480, 7
    %v1515 = vsub.f32 %v1463, %v1483
    %v1516 = vsub.f32 %v1464, %v1484
    %v1517 = vsub.f32 %v1465, %v1485
    %v1518 = vsub.f32 %v1466, %v1486
    %v1519 = vsub.f32 %v1467, %v1487
    %v1520 = vsub.f32 %v1468, %v1488
    %v1521 = vsub.f32 %v1469, %v1489
    %v1522 = vsub.f32 %v1470, %v1490
    %v1523 = vsub.f32 %v1471, %v1491
    %v1524 = vsub.f32 %v1472, %v1492
    %v1525 = vsub.f32 %v1473, %v1493
    %v1526 = vsub.f32 %v1474, %v1494
    %v1527 = vsub.f32 %v1475, %v1495
    %v1528 = vsub.f32 %v1476, %v1496
    %v1529 = vsub.f32 %v1477, %v1497
    %v1530 = vsub.f32 %v1478, %v1498
    %v1531 = vstv %s62
    %v1532 = vmul.f32 %v1531, %v1515
    %v1533 = vmul.f32 %v1531, %v1516
    %v1534 = vmul.f32 %v1531, %v1517
    %v1535 = vmul.f32 %v1531, %v1518
    %v1536 = vmul.f32 %v1531, %v1519
    %v1537 = vmul.f32 %v1531, %v1520
    %v1538 = vmul.f32 %v1531, %v1521
    %v1539 = vmul.f32 %v1531, %v1522
    %v1540 = vmul.f32 %v1531, %v1523
    %v1541 = vmul.f32 %v1531, %v1524
    %v1542 = vmul.f32 %v1531, %v1525
    %v1543 = vmul.f32 %v1531, %v1526
    %v1544 = vmul.f32 %v1531, %v1527
    %v1545 = vmul.f32 %v1531, %v1528
    %v1546 = vmul.f32 %v1531, %v1529
    %v1547 = vmul.f32 %v1531, %v1530
    %v1548 = vmul.f32 %v1532, %v1515
    %v1549 = vmul.f32 %v1533, %v1516
    %v1550 = vmul.f32 %v1534, %v1517
    %v1551 = vmul.f32 %v1535, %v1518
    %v1552 = vmul.f32 %v1536, %v1519
    %v1553 = vmul.f32 %v1537, %v1520
    %v1554 = vmul.f32 %v1538, %v1521
    %v1555 = vmul.f32 %v1539, %v1522
    %v1556 = vmul.f32 %v1540, %v1523
    %v1557 = vmul.f32 %v1541, %v1524
    %v1558 = vmul.f32 %v1542, %v1525
    %v1559 = vmul.f32 %v1543, %v1526
    %v1560 = vmul.f32 %v1544, %v1527
    %v1561 = vmul.f32 %v1545, %v1528
    %v1562 = vmul.f32 %v1546, %v1529
    %v1563 = vmul.f32 %v1547, %v1530
    %v1564 = vmul.f32 %v1548, 1.442695
    %v1565 = vpow.pop %v1564
    %v1566 = vmul.f32 %v1549, 1.442695
    %v1567 = vpow.pop %v1566
    %v1568 = vmul.f32 %v1550, 1.442695
    %v1569 = vpow.pop %v1568
    %v1570 = vmul.f32 %v1551, 1.442695
    %v1571 = vpow.pop %v1570
    %v1572 = vmul.f32 %v1552, 1.442695
    %v1573 = vpow.pop %v1572
    %v1574 = vmul.f32 %v1553, 1.442695
    %v1575 = vpow.pop %v1574
    %v1576 = vmul.f32 %v1554, 1.442695
    %v1577 = vpow.pop %v1576
    %v1578 = vmul.f32 %v1555, 1.442695
    %v1579 = vpow.pop %v1578
    %v1580 = vmul.f32 %v1556, 1.442695
    %v1581 = vpow.pop %v1580
    %v1582 = vmul.f32 %v1557, 1.442695
    %v1583 = vpow.pop %v1582
    %v1584 = vmul.f32 %v1558, 1.442695
    %v1585 = vpow.pop %v1584
    %v1586 = vmul.f32 %v1559, 1.442695
    %v1587 = vpow.pop %v1586
    %v1588 = vmul.f32 %v1560, 1.442695
    %v1589 = vpow.pop %v1588
    %v1590 = vmul.f32 %v1561, 1.442695
    %v1591 = vpow.pop %v1590
    %v1592 = vmul.f32 %v1562, 1.442695
    %v1593 = vpow.pop %v1592
    %v1594 = vmul.f32 %v1563, 1.442695
    %v1595 = vpow.pop %v1594
    %1596 = vst [vmem:[#allocation9] sm:$0xff] %v1565
    %1597 = vst [vmem:[#allocation9 + $0x8] sm:$0xff] %v1567
    %1598 = vst [vmem:[#allocation9 + $0x10] sm:$0xff] %v1569
    %1599 = vst [vmem:[#allocation9 + $0x18] sm:$0xff] %v1571
    %1600 = vst [vmem:[#allocation9 + $0x20] sm:$0xff] %v1573
    %1601 = vst [vmem:[#allocation9 + $0x28] sm:$0xff] %v1575
    %1602 = vst [vmem:[#allocation9 + $0x30] sm:$0xff] %v1577
    %1603 = vst [vmem:[#allocation9 + $0x38] sm:$0xff] %v1579
    %1604 = vst [vmem:[#allocation9 + $0x40] sm:$0xff] %v1581
    %1605 = vst [vmem:[#allocation9 + $0x48] sm:$0xff] %v1583
    %1606 = vst [vmem:[#allocation9 + $0x50] sm:$0xff] %v1585
    %1607 = vst [vmem:[#allocation9 + $0x58] sm:$0xff] %v1587
    %1608 = vst [vmem:[#allocation9 + $0x60] sm:$0xff] %v1589
    %1609 = vst [vmem:[#allocation9 + $0x68] sm:$0xff] %v1591
    %1610 = vst [vmem:[#allocation9 + $0x70] sm:$0xff] %v1593
    %1611 = vst [vmem:[#allocation9 + $0x78] sm:$0xff] %v1595
    // Predicated region
    $region30: #{tpu_custom_call.1} parent=1 // pred_check
      _
    $region31: #{tpu_custom_call.1} parent=1 // pred_check_branch
      %1613 = sbr.rel (0) target = $region33
    $region32: #{tpu_custom_call.1} parent=1 // pred_region
      %1615 = vsyncadd [#allocation5], 0
      %s1617 = sshll.u32 [#allocation9], 4
      %s1618 = int_to_ptr.vmem [resolvable:$true] %s1617
      %s1619 = sshll.u32 %s4, 4
      %s1620 = int_to_ptr.hbm [resolvable:$true] %s1619
      %1622 = dma.vmem_to_hbm [thread:$0]  %s1618, 2048, %s1620, [#allocation5]
    $region33: #{tpu_custom_call.1} parent=1 // pred_fallthru
      _
    // Predicated region
    $region34: #{tpu_custom_call.1} parent=1 // pred_check
      _
    $region35: #{tpu_custom_call.1} parent=1 // pred_check_branch
      %1624 = sbr.rel (0) target = $region37
    $region36: #{tpu_custom_call.1} parent=1 // pred_region
      %1626 = dma.done [#allocation5], 2048
    $region37: #{tpu_custom_call.1} parent=1 // pred_fallthru
      _
    %1627 = vsyncpa [#allocation4], 1
    %1628 = vsyncpa [#allocation7], 1
    %1629 = vsyncpa [#allocation5], 1

</llo_original>
